<compile_context>
chip_gen: v5e
topology: v5e:2x2
jax: 0.10.0
libtpu: 0.0.40
codegen_flags: <defaults>
</compile_context>

<pallas_src>
import functools

import jax
import jax.numpy as jnp
from jax.experimental import pallas as pl
from jax.experimental.pallas import tpu as pltpu


LANE = 128  # TPU lane width: feature dims are padded to multiples of this.


def _round_up(x, m):
    return (x + m - 1) // m * m


def actor_kernel(x_ref, w1_ref, b1_ref, w2_ref, b2_ref, w3_ref, b3_ref,
                 scale_ref, bias_ref, o_ref):
    # Layer 1: Linear (bf16 MXU, f32 accum) + ReLU (f32 VPU)
    h = jnp.dot(x_ref[...].astype(jnp.bfloat16), w1_ref[...],
                preferred_element_type=jnp.float32)
    h = jnp.maximum(h + b1_ref[...], 0.0)
    # Layer 2: Linear + ReLU
    h = jnp.dot(h.astype(jnp.bfloat16), w2_ref[...],
                preferred_element_type=jnp.float32)
    h = jnp.maximum(h + b2_ref[...], 0.0)
    # Layer 3: Linear + Tanh, then action rescaling (all f32)
    h = jnp.dot(h.astype(jnp.bfloat16), w3_ref[...],
                preferred_element_type=jnp.float32)
    h = jnp.tanh(h + b3_ref[...])
    o_ref[...] = (h * scale_ref[...] + bias_ref[...]).astype(o_ref.dtype)


def prepare_params(p):
    """Pad all feature dims to multiples of 128 (zero pad) and cast weights to
    bf16 (MXU-native).  Biases / scale / bias stay f32 for the VPU/EUP math."""
    in_dim, hid = p["w1"].shape
    out_dim = p["w3"].shape[1]
    in_p = _round_up(in_dim, LANE)
    hid_p = _round_up(hid, LANE)
    out_p = _round_up(out_dim, LANE)

    def pad2(a, rows, cols):
        return jnp.pad(a, ((0, rows - a.shape[0]), (0, cols - a.shape[1])))

    prepped = dict(
        w1=pad2(p["w1"], in_p, hid_p).astype(jnp.bfloat16),
        b1=pad2(p["b1"], 1, hid_p),
        w2=pad2(p["w2"], hid_p, hid_p).astype(jnp.bfloat16),
        b2=pad2(p["b2"], 1, hid_p),
        w3=pad2(p["w3"], hid_p, out_p).astype(jnp.bfloat16),
        b3=pad2(p["b3"], 1, out_p),
        action_scale=pad2(p["action_scale"], 1, out_p),
        action_bias=pad2(p["action_bias"], 1, out_p),
    )
    return prepped, out_dim


@functools.partial(jax.jit, static_argnames=("out_dim", "tb"))
def actor_forward(x, prepped, out_dim, *, tb=256):
    """x: (B, input_dim) f32.  prepped: output of prepare_params.  Returns
    (B, out_dim) f32 actions."""
    B, in_dim = x.shape
    in_p = prepped["w1"].shape[0]
    hid_p = prepped["w1"].shape[1]
    out_p = prepped["w3"].shape[1]

    # Batch tile: multiple of 8 sublanes, no bigger than the (padded) batch.
    TB = _round_up(max(8, min(tb, _round_up(B, 8))), 8)
    Bp = _round_up(B, TB)
    nb = Bp // TB

    # Pad batch rows + input features with zeros (sliced off below).
    x_p = jnp.pad(x, ((0, Bp - B), (0, in_p - in_dim)))

    args = (x_p, prepped["w1"], prepped["b1"], prepped["w2"], prepped["b2"],
            prepped["w3"], prepped["b3"], prepped["action_scale"],
            prepped["action_bias"])

    # x / out walk the batch grid; all weights stay resident (constant block).
    resident = lambda shape: pl.BlockSpec(shape, lambda i: (0, 0))
    in_specs = [pl.BlockSpec((TB, in_p), lambda i: (i, 0))] + \
               [resident(a.shape) for a in args[1:]]
    out_specs = pl.BlockSpec((TB, out_p), lambda i: (i, 0))

    flops = 2 * Bp * (in_p * hid_p + hid_p * hid_p + hid_p * out_p)
    bytes_accessed = (x_p.size * 4 + Bp * out_p * 4 +
                      sum(int(a.size) * a.dtype.itemsize for a in args[1:]))
    cost = pl.CostEstimate(flops=flops, transcendentals=Bp * out_p,
                           bytes_accessed=bytes_accessed)

    out_padded = pl.pallas_call(
        actor_kernel,
        out_shape=jax.ShapeDtypeStruct((Bp, out_p), jnp.float32),
        grid_spec=pltpu.PrefetchScalarGridSpec(
            num_scalar_prefetch=0,
            grid=(nb,),
            in_specs=in_specs,
            out_specs=out_specs,
        ),
        compiler_params=pltpu.CompilerParams(
            dimension_semantics=("parallel",)),
        cost_estimate=cost,
    )(*args)

    return out_padded[:B, :out_dim]


def init_params(key, input_dim, output_dim, hidden_dim):
    """Deterministic init mimicking nn.Linear defaults (uniform +-1/sqrt(fan_in)).
    Weights stored transposed: (in_features, out_features)."""
    ks = jax.random.split(key, 6)

    def linear(kw, kb, fan_in, fan_out):
        bound = 1.0 / jnp.sqrt(jnp.float32(fan_in))
        w = jax.random.uniform(kw, (fan_in, fan_out), jnp.float32, -bound, bound)
        b = jax.random.uniform(kb, (1, fan_out), jnp.float32, -bound, bound)
        return w, b

    w1, b1 = linear(ks[0], ks[1], input_dim, hidden_dim)
    w2, b2 = linear(ks[2], ks[3], hidden_dim, hidden_dim)
    w3, b3 = linear(ks[4], ks[5], hidden_dim, output_dim)

    # register_buffer('action_scale'/'action_bias') equivalents, built in-script
    action_scale = jnp.full((1, output_dim), 2.0, dtype=jnp.float32)
    action_bias = jnp.full((1, output_dim), 0.5, dtype=jnp.float32)

    return dict(w1=w1, b1=b1, w2=w2, b2=b2, w3=w3, b3=b3,
                action_scale=action_scale, action_bias=action_bias)


def actor_reference(x, p):
    """Pure-JAX reference using the same bf16 weight quantization the kernel
    stores (activations stay f32 here; the kernel casts them to bf16 for the
    MXU, hence the loose-but-tight-enough tolerance below)."""
    q = lambda w: w.astype(jnp.bfloat16).astype(jnp.float32)
    h = jnp.maximum(x @ q(p["w1"]) + p["b1"], 0.0)
    h = jnp.maximum(h @ q(p["w2"]) + p["b2"], 0.0)
    h = jnp.tanh(h @ q(p["w3"]) + p["b3"])
    return h * p["action_scale"] + p["action_bias"]


if __name__ == "__main__":
    batch, input_dim, hidden_dim, output_dim = 64, 16, 32, 4

    key = jax.random.PRNGKey(0)
    k_x, k_p = jax.random.split(key)
    x = jax.random.normal(k_x, (batch, input_dim), dtype=jnp.float32)
    params = init_params(k_p, input_dim, output_dim, hidden_dim)

    prepped, out_dim = prepare_params(params)

    # tb=32 so the batch grid has >1 step even at this small test size.
    out = actor_forward(x, prepped, out_dim, tb=32)
    out = jax.block_until_ready(out)

    ref = actor_reference(x, params)
    assert out.shape == (batch, output_dim)
    assert jnp.allclose(out, ref, atol=3e-2, rtol=3e-2), "mismatch vs reference"

    print("KERNEL_OK")
</pallas_src>

<mosaic_0001>
module attributes {stable_mosaic.version = 11 : i64} {
  func.func @actor_kernel(%arg0: i32, %arg1: memref<32x128xf32, #tpu.memory_space<vmem>>, %arg2: memref<128x128xbf16, #tpu.memory_space<vmem>>, %arg3: memref<1x128xf32, #tpu.memory_space<vmem>>, %arg4: memref<128x128xbf16, #tpu.memory_space<vmem>>, %arg5: memref<1x128xf32, #tpu.memory_space<vmem>>, %arg6: memref<128x128xbf16, #tpu.memory_space<vmem>>, %arg7: memref<1x128xf32, #tpu.memory_space<vmem>>, %arg8: memref<1x128xf32, #tpu.memory_space<vmem>>, %arg9: memref<1x128xf32, #tpu.memory_space<vmem>>, %arg10: memref<32x128xf32, #tpu.memory_space<vmem>>) attributes {dimension_semantics = [#tpu.dimension_semantics<parallel>], iteration_bounds = array<i64: 2>, scalar_prefetch = 0 : i64, scratch_operands = 0 : i64, tpu.core_type = #tpu.core_type<tc>, window_params = [{transform_indices = @transform_0, window_bounds = array<i64: 32, 128>}, {pipeline_mode = #tpu.pipeline_mode<synchronous>, transform_indices = @transform_1, window_bounds = array<i64: 128, 128>}, {pipeline_mode = #tpu.pipeline_mode<synchronous>, transform_indices = @transform_2, window_bounds = array<i64: 1, 128>}, {pipeline_mode = #tpu.pipeline_mode<synchronous>, transform_indices = @transform_3, window_bounds = array<i64: 128, 128>}, {pipeline_mode = #tpu.pipeline_mode<synchronous>, transform_indices = @transform_4, window_bounds = array<i64: 1, 128>}, {pipeline_mode = #tpu.pipeline_mode<synchronous>, transform_indices = @transform_5, window_bounds = array<i64: 128, 128>}, {pipeline_mode = #tpu.pipeline_mode<synchronous>, transform_indices = @transform_6, window_bounds = array<i64: 1, 128>}, {pipeline_mode = #tpu.pipeline_mode<synchronous>, transform_indices = @transform_7, window_bounds = array<i64: 1, 128>}, {pipeline_mode = #tpu.pipeline_mode<synchronous>, transform_indices = @transform_8, window_bounds = array<i64: 1, 128>}, {transform_indices = @transform_9, window_bounds = array<i64: 32, 128>}]} {
    %c0 = arith.constant 0 : index
    %c0_0 = arith.constant 0 : index
    %0 = vector.load %arg1[%c0, %c0_0] : memref<32x128xf32, #tpu.memory_space<vmem>>, vector<32x128xf32>
    %1 = arith.truncf %0 : vector<32x128xf32> to vector<32x128xbf16>
    %c0_1 = arith.constant 0 : index
    %c0_2 = arith.constant 0 : index
    %2 = vector.load %arg2[%c0_1, %c0_2] : memref<128x128xbf16, #tpu.memory_space<vmem>>, vector<128x128xbf16>
    %cst = arith.constant dense<0.000000e+00> : vector<32x128xf32>
    %3 = tpu.matmul %1, %2, %cst {dimension_numbers = #tpu.dot_dimension_numbers<[1], [0], [0], [1], [0, 0, 1, 1], [], []>} : vector<32x128xbf16>, vector<128x128xbf16>, vector<32x128xf32> -> vector<32x128xf32>
    %c0_3 = arith.constant 0 : index
    %c0_4 = arith.constant 0 : index
    %4 = vector.load %arg3[%c0_3, %c0_4] : memref<1x128xf32, #tpu.memory_space<vmem>>, vector<1x128xf32>
    %5 = vector.broadcast %4 : vector<1x128xf32> to vector<32x128xf32>
    %6 = arith.addf %3, %5 : vector<32x128xf32>
    %cst_5 = arith.constant 0.000000e+00 : f32
    %7 = vector.broadcast %cst_5 : f32 to vector<32x128xf32>
    %8 = arith.maximumf %6, %7 : vector<32x128xf32>
    %9 = arith.truncf %8 : vector<32x128xf32> to vector<32x128xbf16>
    %c0_6 = arith.constant 0 : index
    %c0_7 = arith.constant 0 : index
    %10 = vector.load %arg4[%c0_6, %c0_7] : memref<128x128xbf16, #tpu.memory_space<vmem>>, vector<128x128xbf16>
    %cst_8 = arith.constant dense<0.000000e+00> : vector<32x128xf32>
    %11 = tpu.matmul %9, %10, %cst_8 {dimension_numbers = #tpu.dot_dimension_numbers<[1], [0], [0], [1], [0, 0, 1, 1], [], []>} : vector<32x128xbf16>, vector<128x128xbf16>, vector<32x128xf32> -> vector<32x128xf32>
    %c0_9 = arith.constant 0 : index
    %c0_10 = arith.constant 0 : index
    %12 = vector.load %arg5[%c0_9, %c0_10] : memref<1x128xf32, #tpu.memory_space<vmem>>, vector<1x128xf32>
    %13 = vector.broadcast %12 : vector<1x128xf32> to vector<32x128xf32>
    %14 = arith.addf %11, %13 : vector<32x128xf32>
    %cst_11 = arith.constant 0.000000e+00 : f32
    %15 = vector.broadcast %cst_11 : f32 to vector<32x128xf32>
    %16 = arith.maximumf %14, %15 : vector<32x128xf32>
    %17 = arith.truncf %16 : vector<32x128xf32> to vector<32x128xbf16>
    %c0_12 = arith.constant 0 : index
    %c0_13 = arith.constant 0 : index
    %18 = vector.load %arg6[%c0_12, %c0_13] : memref<128x128xbf16, #tpu.memory_space<vmem>>, vector<128x128xbf16>
    %cst_14 = arith.constant dense<0.000000e+00> : vector<32x128xf32>
    %19 = tpu.matmul %17, %18, %cst_14 {dimension_numbers = #tpu.dot_dimension_numbers<[1], [0], [0], [1], [0, 0, 1, 1], [], []>} : vector<32x128xbf16>, vector<128x128xbf16>, vector<32x128xf32> -> vector<32x128xf32>
    %c0_15 = arith.constant 0 : index
    %c0_16 = arith.constant 0 : index
    %20 = vector.load %arg7[%c0_15, %c0_16] : memref<1x128xf32, #tpu.memory_space<vmem>>, vector<1x128xf32>
    %21 = vector.broadcast %20 : vector<1x128xf32> to vector<32x128xf32>
    %22 = arith.addf %19, %21 : vector<32x128xf32>
    %23 = math.tanh %22 : vector<32x128xf32>
    %c0_17 = arith.constant 0 : index
    %c0_18 = arith.constant 0 : index
    %24 = vector.load %arg8[%c0_17, %c0_18] : memref<1x128xf32, #tpu.memory_space<vmem>>, vector<1x128xf32>
    %25 = vector.broadcast %24 : vector<1x128xf32> to vector<32x128xf32>
    %26 = arith.mulf %23, %25 : vector<32x128xf32>
    %c0_19 = arith.constant 0 : index
    %c0_20 = arith.constant 0 : index
    %27 = vector.load %arg9[%c0_19, %c0_20] : memref<1x128xf32, #tpu.memory_space<vmem>>, vector<1x128xf32>
    %28 = vector.broadcast %27 : vector<1x128xf32> to vector<32x128xf32>
    %29 = arith.addf %26, %28 : vector<32x128xf32>
    %c0_21 = arith.constant 0 : index
    %c0_22 = arith.constant 0 : index
    %30 = vector.load %arg10[%c0_21, %c0_22] : memref<32x128xf32, #tpu.memory_space<vmem>>, vector<32x128xf32>
    tpu.vector_store %arg10[%c0_21, %c0_22], %29 {strides = array<i32>} : memref<32x128xf32, #tpu.memory_space<vmem>>, vector<32x128xf32>,
    return
  }
  func.func @transform_0(%arg0: i32) -> (i32, i32) {
    %c0_i32 = arith.constant 0 : i32
    %c0_i32_0 = arith.constant 0 : i32
    return %arg0, %c0_i32 : i32, i32
  }
  func.func @transform_1(%arg0: i32) -> (i32, i32) {
    %c0_i32 = arith.constant 0 : i32
    %c0_i32_0 = arith.constant 0 : i32
    %c0_i32_1 = arith.constant 0 : i32
    return %c0_i32, %c0_i32_0 : i32, i32
  }
  func.func @transform_2(%arg0: i32) -> (i32, i32) {
    %c0_i32 = arith.constant 0 : i32
    %c0_i32_0 = arith.constant 0 : i32
    %c0_i32_1 = arith.constant 0 : i32
    return %c0_i32, %c0_i32_0 : i32, i32
  }
  func.func @transform_3(%arg0: i32) -> (i32, i32) {
    %c0_i32 = arith.constant 0 : i32
    %c0_i32_0 = arith.constant 0 : i32
    %c0_i32_1 = arith.constant 0 : i32
    return %c0_i32, %c0_i32_0 : i32, i32
  }
  func.func @transform_4(%arg0: i32) -> (i32, i32) {
    %c0_i32 = arith.constant 0 : i32
    %c0_i32_0 = arith.constant 0 : i32
    %c0_i32_1 = arith.constant 0 : i32
    return %c0_i32, %c0_i32_0 : i32, i32
  }
  func.func @transform_5(%arg0: i32) -> (i32, i32) {
    %c0_i32 = arith.constant 0 : i32
    %c0_i32_0 = arith.constant 0 : i32
    %c0_i32_1 = arith.constant 0 : i32
    return %c0_i32, %c0_i32_0 : i32, i32
  }
  func.func @transform_6(%arg0: i32) -> (i32, i32) {
    %c0_i32 = arith.constant 0 : i32
    %c0_i32_0 = arith.constant 0 : i32
    %c0_i32_1 = arith.constant 0 : i32
    return %c0_i32, %c0_i32_0 : i32, i32
  }
  func.func @transform_7(%arg0: i32) -> (i32, i32) {
    %c0_i32 = arith.constant 0 : i32
    %c0_i32_0 = arith.constant 0 : i32
    %c0_i32_1 = arith.constant 0 : i32
    return %c0_i32, %c0_i32_0 : i32, i32
  }
  func.func @transform_8(%arg0: i32) -> (i32, i32) {
    %c0_i32 = arith.constant 0 : i32
    %c0_i32_0 = arith.constant 0 : i32
    %c0_i32_1 = arith.constant 0 : i32
    return %c0_i32, %c0_i32_0 : i32, i32
  }
  func.func @transform_9(%arg0: i32) -> (i32, i32) {
    %c0_i32 = arith.constant 0 : i32
    %c0_i32_0 = arith.constant 0 : i32
    return %arg0, %c0_i32 : i32, i32
  }
}

</mosaic_0001>

<llo_original>
// kernel: actor_forward.1
$region0: #{actor_forward.1}
  #allocation0 [shape = 'u32[]', space=smem, size = 0x4, offset = 0x4, fixed_abs, tag = 'smem constant byte address 0x4 - core index']
  #allocation1 [shape = 'u32[72,128]{1,0:T(1,128)}', space=vmem, size = 0x9000, scoped, tag = 'internal scratch']
  %s0 = inlined_call_operand.vmem [shape: f32[64,128], index: 0, kind: input, shape index: {}]
  %s1 = inlined_call_operand.vmem [shape: bf16[128,128], index: 1, kind: input, shape index: {}]
  %s2 = inlined_call_operand.vmem [shape: f32[1,128], index: 2, kind: input, shape index: {}]
  %s3 = inlined_call_operand.vmem [shape: bf16[128,128], index: 3, kind: input, shape index: {}]
  %s4 = inlined_call_operand.vmem [shape: f32[1,128], index: 4, kind: input, shape index: {}]
  %s5 = inlined_call_operand.vmem [shape: bf16[128,128], index: 5, kind: input, shape index: {}]
  %s6 = inlined_call_operand.vmem [shape: f32[1,128], index: 6, kind: input, shape index: {}]
  %s7 = inlined_call_operand.vmem [shape: f32[1,128], index: 7, kind: input, shape index: {}]
  %s8 = inlined_call_operand.vmem [shape: f32[1,128], index: 8, kind: input, shape index: {}]
  %s9 = inlined_call_operand.vmem [shape: f32[64,128], index: 9, kind: output, shape index: {}]
  %s10 = sld [smem:[#allocation0]]
  $region69: #{actor_forward.1} parent=0
    _
  %s12 = ssub.s32 1, %s10
  %s13 = scalar_select 0, %s12, %s10
  loop: start=0, step=1, limit=4
  $region2: #{actor_forward.1} parent=0 // loop_pre_header
    _
  $region3: #{actor_forward.1} parent=0 // loop_header
    %s15 = sphi 0, %s19
    %p16 = scmp.ge.s32.totalorder %s15, 4
    %s25 = sphi 0, %s27
    %s28 = sphi 0, %s25
    %s29 = sphi 0, %s28
    %s45 = sphi 0, %s29
    %s49 = sphi 0, %s49
    %s51 = sphi 0, %s49
    %s52 = sphi 0, %s51
    %s66 = sphi 0, %s52
    %s70 = sphi 0, %s70
    %s72 = sphi 0, %s70
    %s73 = sphi 0, %s72
    %s87 = sphi 0, %s73
    %s91 = sphi 0, %s91
    %s93 = sphi 0, %s91
    %s94 = sphi 0, %s93
    %s108 = sphi 0, %s94
    %s112 = sphi 0, %s112
    %s114 = sphi 0, %s112
    %s115 = sphi 0, %s114
    %s129 = sphi 0, %s115
    %s133 = sphi 0, %s133
    %s135 = sphi 0, %s133
    %s136 = sphi 0, %s135
    %s150 = sphi 0, %s136
    %s154 = sphi 0, %s154
    %s156 = sphi 0, %s154
    %s157 = sphi 0, %s156
    %s171 = sphi 0, %s157
    %s175 = sphi 0, %s175
    %s177 = sphi 0, %s175
    %s178 = sphi 0, %s177
    %s192 = sphi 0, %s178
    %s196 = sphi 0, %s196
    %s198 = sphi 0, %s196
    %s199 = sphi 0, %s198
    %s213 = sphi 0, %s199
    %s219 = sphi 0, %s221
    %s222 = sphi 0, %s219
    %s223 = sphi 0, %s222
    %s239 = sphi 0, %s223
  $region4: #{actor_forward.1} parent=0 // loop_header_branch
    %18 = sbr.rel (%p16) target = $region8
  $region5: #{actor_forward.1} parent=0 // loop_body
    %s20 = ssub.s32 %s15, 1
    %s21 = ssub.s32 %s15, 2
    %s22 = sadd.s32 %s15, 1
    %s23 = ssub.s32 %s15, %s22
    %p24 = scmp.eq.s32.totalorder %s23, 0
    %s26 = sadd.s32 %s25, 1
    %s27 = scalar_select %p24, %s25, %s26
    %p30 = pneg %p24
    %p31 = scmp.eq.s32.totalorder %s15, 1
    %p32 = por %p30, %p31
    %p33 = scmp.ne.s32.totalorder %s25, %s28
    %p34 = scmp.eq.s32.totalorder %s15, 0
    %p35 = por %p33, %p34
    %p36 = scmp.ne.s32.totalorder %s25, %s28
    %p37 = scmp.eq.s32.totalorder %s20, 1
    %p38 = por %p36, %p37
    %p39 = scmp.ne.s32.totalorder %s28, %s29
    %p40 = scmp.eq.s32.totalorder %s20, 0
    %p41 = por %p39, %p40
    %p42 = scmp.ne.s32.totalorder %s28, %s29
    %p43 = scmp.eq.s32.totalorder %s21, 1
    %p44 = por %p42, %p43
    %p46 = scmp.ne.s32.totalorder %s29, %s45
    %p47 = scmp.eq.s32.totalorder %s21, 0
    %p48 = por %p46, %p47
    %s50 = sadd.s32 %s49, 1
    %p53 = scmp.eq.s32.totalorder %s15, 1
    %p54 = scmp.ne.s32.totalorder %s49, %s51
    %p55 = scmp.eq.s32.totalorder %s15, 0
    %p56 = por %p54, %p55
    %p57 = scmp.ne.s32.totalorder %s49, %s51
    %p58 = scmp.eq.s32.totalorder %s20, 1
    %p59 = por %p57, %p58
    %p60 = scmp.ne.s32.totalorder %s51, %s52
    %p61 = scmp.eq.s32.totalorder %s20, 0
    %p62 = por %p60, %p61
    %p63 = scmp.ne.s32.totalorder %s51, %s52
    %p64 = scmp.eq.s32.totalorder %s21, 1
    %p65 = por %p63, %p64
    %p67 = scmp.ne.s32.totalorder %s52, %s66
    %p68 = scmp.eq.s32.totalorder %s21, 0
    %p69 = por %p67, %p68
    %s71 = sadd.s32 %s70, 1
    %p74 = scmp.eq.s32.totalorder %s15, 1
    %p75 = scmp.ne.s32.totalorder %s70, %s72
    %p76 = scmp.eq.s32.totalorder %s15, 0
    %p77 = por %p75, %p76
    %p78 = scmp.ne.s32.totalorder %s70, %s72
    %p79 = scmp.eq.s32.totalorder %s20, 1
    %p80 = por %p78, %p79
    %p81 = scmp.ne.s32.totalorder %s72, %s73
    %p82 = scmp.eq.s32.totalorder %s20, 0
    %p83 = por %p81, %p82
    %p84 = scmp.ne.s32.totalorder %s72, %s73
    %p85 = scmp.eq.s32.totalorder %s21, 1
    %p86 = por %p84, %p85
    %p88 = scmp.ne.s32.totalorder %s73, %s87
    %p89 = scmp.eq.s32.totalorder %s21, 0
    %p90 = por %p88, %p89
    %s92 = sadd.s32 %s91, 1
    %p95 = scmp.eq.s32.totalorder %s15, 1
    %p96 = scmp.ne.s32.totalorder %s91, %s93
    %p97 = scmp.eq.s32.totalorder %s15, 0
    %p98 = por %p96, %p97
    %p99 = scmp.ne.s32.totalorder %s91, %s93
    %p100 = scmp.eq.s32.totalorder %s20, 1
    %p101 = por %p99, %p100
    %p102 = scmp.ne.s32.totalorder %s93, %s94
    %p103 = scmp.eq.s32.totalorder %s20, 0
    %p104 = por %p102, %p103
    %p105 = scmp.ne.s32.totalorder %s93, %s94
    %p106 = scmp.eq.s32.totalorder %s21, 1
    %p107 = por %p105, %p106
    %p109 = scmp.ne.s32.totalorder %s94, %s108
    %p110 = scmp.eq.s32.totalorder %s21, 0
    %p111 = por %p109, %p110
    %s113 = sadd.s32 %s112, 1
    %p116 = scmp.eq.s32.totalorder %s15, 1
    %p117 = scmp.ne.s32.totalorder %s112, %s114
    %p118 = scmp.eq.s32.totalorder %s15, 0
    %p119 = por %p117, %p118
    %p120 = scmp.ne.s32.totalorder %s112, %s114
    %p121 = scmp.eq.s32.totalorder %s20, 1
    %p122 = por %p120, %p121
    %p123 = scmp.ne.s32.totalorder %s114, %s115
    %p124 = scmp.eq.s32.totalorder %s20, 0
    %p125 = por %p123, %p124
    %p126 = scmp.ne.s32.totalorder %s114, %s115
    %p127 = scmp.eq.s32.totalorder %s21, 1
    %p128 = por %p126, %p127
    %p130 = scmp.ne.s32.totalorder %s115, %s129
    %p131 = scmp.eq.s32.totalorder %s21, 0
    %p132 = por %p130, %p131
    %s134 = sadd.s32 %s133, 1
    %p137 = scmp.eq.s32.totalorder %s15, 1
    %p138 = scmp.ne.s32.totalorder %s133, %s135
    %p139 = scmp.eq.s32.totalorder %s15, 0
    %p140 = por %p138, %p139
    %p141 = scmp.ne.s32.totalorder %s133, %s135
    %p142 = scmp.eq.s32.totalorder %s20, 1
    %p143 = por %p141, %p142
    %p144 = scmp.ne.s32.totalorder %s135, %s136
    %p145 = scmp.eq.s32.totalorder %s20, 0
    %p146 = por %p144, %p145
    %p147 = scmp.ne.s32.totalorder %s135, %s136
    %p148 = scmp.eq.s32.totalorder %s21, 1
    %p149 = por %p147, %p148
    %p151 = scmp.ne.s32.totalorder %s136, %s150
    %p152 = scmp.eq.s32.totalorder %s21, 0
    %p153 = por %p151, %p152
    %s155 = sadd.s32 %s154, 1
    %p158 = scmp.eq.s32.totalorder %s15, 1
    %p159 = scmp.ne.s32.totalorder %s154, %s156
    %p160 = scmp.eq.s32.totalorder %s15, 0
    %p161 = por %p159, %p160
    %p162 = scmp.ne.s32.totalorder %s154, %s156
    %p163 = scmp.eq.s32.totalorder %s20, 1
    %p164 = por %p162, %p163
    %p165 = scmp.ne.s32.totalorder %s156, %s157
    %p166 = scmp.eq.s32.totalorder %s20, 0
    %p167 = por %p165, %p166
    %p168 = scmp.ne.s32.totalorder %s156, %s157
    %p169 = scmp.eq.s32.totalorder %s21, 1
    %p170 = por %p168, %p169
    %p172 = scmp.ne.s32.totalorder %s157, %s171
    %p173 = scmp.eq.s32.totalorder %s21, 0
    %p174 = por %p172, %p173
    %s176 = sadd.s32 %s175, 1
    %p179 = scmp.eq.s32.totalorder %s15, 1
    %p180 = scmp.ne.s32.totalorder %s175, %s177
    %p181 = scmp.eq.s32.totalorder %s15, 0
    %p182 = por %p180, %p181
    %p183 = scmp.ne.s32.totalorder %s175, %s177
    %p184 = scmp.eq.s32.totalorder %s20, 1
    %p185 = por %p183, %p184
    %p186 = scmp.ne.s32.totalorder %s177, %s178
    %p187 = scmp.eq.s32.totalorder %s20, 0
    %p188 = por %p186, %p187
    %p189 = scmp.ne.s32.totalorder %s177, %s178
    %p190 = scmp.eq.s32.totalorder %s21, 1
    %p191 = por %p189, %p190
    %p193 = scmp.ne.s32.totalorder %s178, %s192
    %p194 = scmp.eq.s32.totalorder %s21, 0
    %p195 = por %p193, %p194
    %s197 = sadd.s32 %s196, 1
    %p200 = scmp.eq.s32.totalorder %s15, 1
    %p201 = scmp.ne.s32.totalorder %s196, %s198
    %p202 = scmp.eq.s32.totalorder %s15, 0
    %p203 = por %p201, %p202
    %p204 = scmp.ne.s32.totalorder %s196, %s198
    %p205 = scmp.eq.s32.totalorder %s20, 1
    %p206 = por %p204, %p205
    %p207 = scmp.ne.s32.totalorder %s198, %s199
    %p208 = scmp.eq.s32.totalorder %s20, 0
    %p209 = por %p207, %p208
    %p210 = scmp.ne.s32.totalorder %s198, %s199
    %p211 = scmp.eq.s32.totalorder %s21, 1
    %p212 = por %p210, %p211
    %p214 = scmp.ne.s32.totalorder %s199, %s213
    %p215 = scmp.eq.s32.totalorder %s21, 0
    %p216 = por %p214, %p215
    %s217 = ssub.s32 %s15, %s22
    %p218 = scmp.eq.s32.totalorder %s217, 0
    %s220 = sadd.s32 %s219, 1
    %s221 = scalar_select %p218, %s219, %s220
    %p224 = pneg %p218
    %p225 = scmp.eq.s32.totalorder %s15, 1
    %p226 = por %p224, %p225
    %p227 = scmp.ne.s32.totalorder %s219, %s222
    %p228 = scmp.eq.s32.totalorder %s15, 0
    %p229 = por %p227, %p228
    %p230 = scmp.ne.s32.totalorder %s219, %s222
    %p231 = scmp.eq.s32.totalorder %s20, 1
    %p232 = por %p230, %p231
    %p233 = scmp.ne.s32.totalorder %s222, %s223
    %p234 = scmp.eq.s32.totalorder %s20, 0
    %p235 = por %p233, %p234
    %p236 = scmp.ne.s32.totalorder %s222, %s223
    %p237 = scmp.eq.s32.totalorder %s21, 1
    %p238 = por %p236, %p237
    %p240 = scmp.ne.s32.totalorder %s223, %s239
    %p241 = scmp.eq.s32.totalorder %s21, 0
    %p242 = por %p240, %p241
    %p243 = scmp.le.s32.totalorder 1, %s15
    %p244 = scmp.lt.s32.totalorder %s15, 3
    %p245 = pnand %p243, %p244
    %p246 = pneg %p245
    // Predicated region
    $region9: #{actor_forward.1} parent=5 // pred_check
      _
    $region10: #{actor_forward.1} parent=5 // pred_check_branch
      %248 = sbr.rel (%p245) target = $region12
    $region11: #{actor_forward.1} parent=5 // pred_region
      %s249 = ssub.s32 %s15, 1
      // Predicated region
      $region13: #{actor_forward.1} parent=11 // pred_check
        %p250 = pneg %p62
      $region14: #{actor_forward.1} parent=11 // pred_check_branch
        %252 = sbr.rel (%p250) target = $region16
      $region15: #{actor_forward.1} parent=11 // pred_region
        _
      $region16: #{actor_forward.1} parent=11 // pred_fallthru
        _
      // Predicated region
      $region17: #{actor_forward.1} parent=11 // pred_check
        %p253 = pneg %p83
      $region18: #{actor_forward.1} parent=11 // pred_check_branch
        %255 = sbr.rel (%p253) target = $region20
      $region19: #{actor_forward.1} parent=11 // pred_region
        _
      $region20: #{actor_forward.1} parent=11 // pred_fallthru
        _
      // Predicated region
      $region21: #{actor_forward.1} parent=11 // pred_check
        %p256 = pneg %p104
      $region22: #{actor_forward.1} parent=11 // pred_check_branch
        %258 = sbr.rel (%p256) target = $region24
      $region23: #{actor_forward.1} parent=11 // pred_region
        _
      $region24: #{actor_forward.1} parent=11 // pred_fallthru
        _
      // Predicated region
      $region25: #{actor_forward.1} parent=11 // pred_check
        %p259 = pneg %p125
      $region26: #{actor_forward.1} parent=11 // pred_check_branch
        %261 = sbr.rel (%p259) target = $region28
      $region27: #{actor_forward.1} parent=11 // pred_region
        _
      $region28: #{actor_forward.1} parent=11 // pred_fallthru
        _
      // Predicated region
      $region29: #{actor_forward.1} parent=11 // pred_check
        %p262 = pneg %p146
      $region30: #{actor_forward.1} parent=11 // pred_check_branch
        %264 = sbr.rel (%p262) target = $region32
      $region31: #{actor_forward.1} parent=11 // pred_region
        _
      $region32: #{actor_forward.1} parent=11 // pred_fallthru
        _
      // Predicated region
      $region33: #{actor_forward.1} parent=11 // pred_check
        %p265 = pneg %p167
      $region34: #{actor_forward.1} parent=11 // pred_check_branch
        %267 = sbr.rel (%p265) target = $region36
      $region35: #{actor_forward.1} parent=11 // pred_region
        _
      $region36: #{actor_forward.1} parent=11 // pred_fallthru
        _
      // Predicated region
      $region37: #{actor_forward.1} parent=11 // pred_check
        %p268 = pneg %p188
      $region38: #{actor_forward.1} parent=11 // pred_check_branch
        %270 = sbr.rel (%p268) target = $region40
      $region39: #{actor_forward.1} parent=11 // pred_region
        _
      $region40: #{actor_forward.1} parent=11 // pred_fallthru
        _
      // Predicated region
      $region41: #{actor_forward.1} parent=11 // pred_check
        %p271 = pneg %p209
      $region42: #{actor_forward.1} parent=11 // pred_check_branch
        %273 = sbr.rel (%p271) target = $region44
      $region43: #{actor_forward.1} parent=11 // pred_region
        _
      $region44: #{actor_forward.1} parent=11 // pred_fallthru
        _
    $region12: #{actor_forward.1} parent=5 // pred_fallthru
      _
    %p274 = scmp.lt.s32.totalorder %s15, 2
    // Predicated region
    $region45: #{actor_forward.1} parent=5 // pred_check
      %p275 = pneg %p274
    $region46: #{actor_forward.1} parent=5 // pred_check_branch
      %277 = sbr.rel (%p275) target = $region48
    $region47: #{actor_forward.1} parent=5 // pred_region
      // Predicated region
      $region49: #{actor_forward.1} parent=47 // pred_check
        %p278 = pneg %p35
      $region50: #{actor_forward.1} parent=47 // pred_check_branch
        %280 = sbr.rel (%p278) target = $region52
      $region51: #{actor_forward.1} parent=47 // pred_region
        %s281 = smul.u32 4, %s15
        %p282 = scmp.lt.s32.totalorder %s281, 7
        %s283 = scalar_select %p282, %s281, 7
        %s284 = smul.addr %s283, 8
        %s285 = scalar_lea.vmem %s0, %s284
        %s286 = smul.u32 4, %s15
      $region52: #{actor_forward.1} parent=47 // pred_fallthru
        _
    $region48: #{actor_forward.1} parent=5 // pred_fallthru
      _
    %p287 = scmp.le.s32.totalorder 1, %s15
    %p288 = scmp.lt.s32.totalorder %s15, 3
    %p289 = pnand %p287, %p288
    %p290 = pneg %p289
    // Predicated region
    $region53: #{actor_forward.1} parent=5 // pred_check
      _
    $region54: #{actor_forward.1} parent=5 // pred_check_branch
      %292 = sbr.rel (%p289) target = $region56
    $region55: #{actor_forward.1} parent=5 // pred_region
      %s293 = ssub.s32 %s15, 1
      %s294 = smul.u32 4, %s20
      %p295 = scmp.lt.s32.totalorder %s294, 7
      %s296 = scalar_select %p295, %s294, 7
      %s297 = smul.addr %s296, 8
      %s298 = scalar_lea.vmem %s0, %s297
      %p299 = pneg %p41
      %p300 = pneg %p38
      %p301 = pneg %p62
      %p302 = pneg %p59
      %p303 = pneg %p83
      %p304 = pneg %p80
      %p305 = pneg %p104
      %p306 = pneg %p101
      %p307 = pneg %p125
      %p308 = pneg %p122
      %p309 = pneg %p146
      %p310 = pneg %p143
      %p311 = pneg %p167
      %p312 = pneg %p164
      %p313 = pneg %p188
      %p314 = pneg %p185
      %p315 = pneg %p209
      %p316 = pneg %p206
      %p317 = pneg %p235
      %p318 = pneg %p232
      %s319 = smul.u32 4, %s20
      %p320 = scmp.lt.s32.totalorder %s319, 7
      %s321 = scalar_select %p320, %s319, 7
      %s322 = smul.addr %s321, 8
      %s323 = scalar_lea.vmem %s9, %s322
      %s324 = smul.u32 4, %s20
      %p325 = scmp.lt.s32.totalorder %s324, 7
      %s326 = scalar_select %p325, %s324, 7
      %s327 = smul.addr %s326, 8
      %s328 = scalar_lea.vmem %s0, %s327
      %s329 = smul.u32 4, %s20
      %s330 = smul.u32 4, %s20
      %p331 = scmp.lt.s32.totalorder %s330, 7
      %s332 = scalar_select %p331, %s330, 7
      %s333 = smul.addr %s332, 8
      %s334 = scalar_lea.vmem %s9, %s333
      %s335 = smul.u32 4, %s20
      %v336 = vld [vmem:[%s328] sm:$0xff]
      %v337 = vld [vmem:[%s328 + $0x8] sm:$0xff]
      %v338 = vld [vmem:[%s328 + $0x10] sm:$0xff]
      %v339 = vld [vmem:[%s328 + $0x18] sm:$0xff]
      %v340 = vpack.c.bf16 %v337, %v336
      %v341 = vpack.c.bf16 %v339, %v338
      %v342 = vld [vmem:[%s1] sm:$0xf]
      %v343 = vld [vmem:[%s1 + $0x4] sm:$0xf]
      %v344 = vld [vmem:[%s1 + $0x8] sm:$0xf]
      %v345 = vld [vmem:[%s1 + $0xc] sm:$0xf]
      %v346 = vld [vmem:[%s1 + $0x10] sm:$0xf]
      %v347 = vld [vmem:[%s1 + $0x14] sm:$0xf]
      %v348 = vld [vmem:[%s1 + $0x18] sm:$0xf]
      %v349 = vld [vmem:[%s1 + $0x1c] sm:$0xf]
      %v350 = vld [vmem:[%s1 + $0x20] sm:$0xf]
      %v351 = vld [vmem:[%s1 + $0x24] sm:$0xf]
      %v352 = vld [vmem:[%s1 + $0x28] sm:$0xf]
      %v353 = vld [vmem:[%s1 + $0x2c] sm:$0xf]
      %v354 = vld [vmem:[%s1 + $0x30] sm:$0xf]
      %v355 = vld [vmem:[%s1 + $0x34] sm:$0xf]
      %v356 = vld [vmem:[%s1 + $0x38] sm:$0xf]
      %v357 = vld [vmem:[%s1 + $0x3c] sm:$0xf]
      %v358 = vld [vmem:[%s2] sm:$0x1]
      %v360 = vperm.slane %v358, 0
      %v378 = vunpack.c.l.b16 %v342
      %v379 = vunpack.c.l.b16 %v343
      %v380 = vunpack.c.l.b16 %v344
      %v381 = vunpack.c.l.b16 %v345
      %v382 = vunpack.c.l.b16 %v346
      %v383 = vunpack.c.l.b16 %v347
      %v384 = vunpack.c.l.b16 %v348
      %v385 = vunpack.c.l.b16 %v349
      %v386 = vunpack.c.l.b16 %v350
      %v387 = vunpack.c.l.b16 %v351
      %v388 = vunpack.c.l.b16 %v352
      %v389 = vunpack.c.l.b16 %v353
      %v390 = vunpack.c.l.b16 %v354
      %v391 = vunpack.c.l.b16 %v355
      %v392 = vunpack.c.l.b16 %v356
      %v393 = vunpack.c.l.b16 %v357
      %v394 = vpack.c.b16 %v379, %v378
      %v395 = vpack.c.b16 %v381, %v380
      %v396 = vpack.c.b16 %v383, %v382
      %v397 = vpack.c.b16 %v385, %v384
      %v398 = vpack.c.b16 %v387, %v386
      %v399 = vpack.c.b16 %v389, %v388
      %v400 = vpack.c.b16 %v391, %v390
      %v401 = vpack.c.b16 %v393, %v392
      %410 = vmatpush.bf16.msra.mxu0 %v401
      %411 = vmatpush.bf16.msra.mxu0 %v400
      %412 = vmatpush.bf16.msra.mxu0 %v399
      %413 = vmatpush.bf16.msra.mxu0 %v398
      %414 = vmatpush.bf16.msra.mxu0 %v397
      %415 = vmatpush.bf16.msra.mxu0 %v396
      %416 = vmatpush.bf16.msra.mxu0 %v395
      %417 = vmatpush.bf16.msra.mxu0 %v394
      %418 = vmatmul.bf16.gmra.mxu0 %v340
      %v419 = vpop.f32.mrf.mxu0
      %v420 = vadd.f32 %v360, %v419
      %v421 = vpop.f32.mrf.mxu0
      %v422 = vadd.f32 %v360, %v421
      %423 = vmatmul.bf16.gmra.mxu0 %v341
      %v424 = vpop.f32.mrf.mxu0
      %v425 = vadd.f32 %v360, %v424
      %v426 = vpop.f32.mrf.mxu0
      %v427 = vadd.f32 %v360, %v426
      %428 = vdwg.mxu0
      %v429 = vmax.f32 %v420, 0.0
      %v430 = vmax.f32 %v422, 0.0
      %v431 = vmax.f32 %v425, 0.0
      %v432 = vmax.f32 %v427, 0.0
      %v433 = vpack.c.bf16 %v430, %v429
      %v434 = vpack.c.bf16 %v432, %v431
      %v435 = vld [vmem:[%s3] sm:$0xf]
      %v436 = vld [vmem:[%s3 + $0x4] sm:$0xf]
      %v437 = vld [vmem:[%s3 + $0x8] sm:$0xf]
      %v438 = vld [vmem:[%s3 + $0xc] sm:$0xf]
      %v439 = vld [vmem:[%s3 + $0x10] sm:$0xf]
      %v440 = vld [vmem:[%s3 + $0x14] sm:$0xf]
      %v441 = vld [vmem:[%s3 + $0x18] sm:$0xf]
      %v442 = vld [vmem:[%s3 + $0x1c] sm:$0xf]
      %v443 = vld [vmem:[%s3 + $0x20] sm:$0xf]
      %v444 = vld [vmem:[%s3 + $0x24] sm:$0xf]
      %v445 = vld [vmem:[%s3 + $0x28] sm:$0xf]
      %v446 = vld [vmem:[%s3 + $0x2c] sm:$0xf]
      %v447 = vld [vmem:[%s3 + $0x30] sm:$0xf]
      %v448 = vld [vmem:[%s3 + $0x34] sm:$0xf]
      %v449 = vld [vmem:[%s3 + $0x38] sm:$0xf]
      %v450 = vld [vmem:[%s3 + $0x3c] sm:$0xf]
      %v451 = vld [vmem:[%s4] sm:$0x1]
      %v453 = vperm.slane %v451, 0
      %v471 = vunpack.c.l.b16 %v435
      %v472 = vunpack.c.l.b16 %v436
      %v473 = vunpack.c.l.b16 %v437
      %v474 = vunpack.c.l.b16 %v438
      %v475 = vunpack.c.l.b16 %v439
      %v476 = vunpack.c.l.b16 %v440
      %v477 = vunpack.c.l.b16 %v441
      %v478 = vunpack.c.l.b16 %v442
      %v479 = vunpack.c.l.b16 %v443
      %v480 = vunpack.c.l.b16 %v444
      %v481 = vunpack.c.l.b16 %v445
      %v482 = vunpack.c.l.b16 %v446
      %v483 = vunpack.c.l.b16 %v447
      %v484 = vunpack.c.l.b16 %v448
      %v485 = vunpack.c.l.b16 %v449
      %v486 = vunpack.c.l.b16 %v450
      %v487 = vpack.c.b16 %v472, %v471
      %v488 = vpack.c.b16 %v474, %v473
      %v489 = vpack.c.b16 %v476, %v475
      %v490 = vpack.c.b16 %v478, %v477
      %v491 = vpack.c.b16 %v480, %v479
      %v492 = vpack.c.b16 %v482, %v481
      %v493 = vpack.c.b16 %v484, %v483
      %v494 = vpack.c.b16 %v486, %v485
      %503 = vmatpush.bf16.msra.mxu0 %v494
      %504 = vmatpush.bf16.msra.mxu0 %v493
      %505 = vmatpush.bf16.msra.mxu0 %v492
      %506 = vmatpush.bf16.msra.mxu0 %v491
      %507 = vmatpush.bf16.msra.mxu0 %v490
      %508 = vmatpush.bf16.msra.mxu0 %v489
      %509 = vmatpush.bf16.msra.mxu0 %v488
      %510 = vmatpush.bf16.msra.mxu0 %v487
      %511 = vmatmul.bf16.gmra.mxu0 %v433
      %v512 = vpop.f32.mrf.mxu0
      %v513 = vadd.f32 %v453, %v512
      %v514 = vpop.f32.mrf.mxu0
      %v515 = vadd.f32 %v453, %v514
      %516 = vmatmul.bf16.gmra.mxu0 %v434
      %v517 = vpop.f32.mrf.mxu0
      %v518 = vadd.f32 %v453, %v517
      %v519 = vpop.f32.mrf.mxu0
      %v520 = vadd.f32 %v453, %v519
      %521 = vdwg.mxu0
      %v522 = vmax.f32 %v513, 0.0
      %v523 = vmax.f32 %v515, 0.0
      %v524 = vmax.f32 %v518, 0.0
      %v525 = vmax.f32 %v520, 0.0
      %v526 = vpack.c.bf16 %v523, %v522
      %v527 = vpack.c.bf16 %v525, %v524
      %v528 = vld [vmem:[%s5] sm:$0xf]
      %v529 = vld [vmem:[%s5 + $0x4] sm:$0xf]
      %v530 = vld [vmem:[%s5 + $0x8] sm:$0xf]
      %v531 = vld [vmem:[%s5 + $0xc] sm:$0xf]
      %v532 = vld [vmem:[%s5 + $0x10] sm:$0xf]
      %v533 = vld [vmem:[%s5 + $0x14] sm:$0xf]
      %v534 = vld [vmem:[%s5 + $0x18] sm:$0xf]
      %v535 = vld [vmem:[%s5 + $0x1c] sm:$0xf]
      %v536 = vld [vmem:[%s5 + $0x20] sm:$0xf]
      %v537 = vld [vmem:[%s5 + $0x24] sm:$0xf]
      %v538 = vld [vmem:[%s5 + $0x28] sm:$0xf]
      %v539 = vld [vmem:[%s5 + $0x2c] sm:$0xf]
      %v540 = vld [vmem:[%s5 + $0x30] sm:$0xf]
      %v541 = vld [vmem:[%s5 + $0x34] sm:$0xf]
      %v542 = vld [vmem:[%s5 + $0x38] sm:$0xf]
      %v543 = vld [vmem:[%s5 + $0x3c] sm:$0xf]
      %v544 = vld [vmem:[%s6] sm:$0x1]
      %v546 = vperm.slane %v544, 0
      %v564 = vunpack.c.l.b16 %v528
      %v565 = vunpack.c.l.b16 %v529
      %v566 = vunpack.c.l.b16 %v530
      %v567 = vunpack.c.l.b16 %v531
      %v568 = vunpack.c.l.b16 %v532
      %v569 = vunpack.c.l.b16 %v533
      %v570 = vunpack.c.l.b16 %v534
      %v571 = vunpack.c.l.b16 %v535
      %v572 = vunpack.c.l.b16 %v536
      %v573 = vunpack.c.l.b16 %v537
      %v574 = vunpack.c.l.b16 %v538
      %v575 = vunpack.c.l.b16 %v539
      %v576 = vunpack.c.l.b16 %v540
      %v577 = vunpack.c.l.b16 %v541
      %v578 = vunpack.c.l.b16 %v542
      %v579 = vunpack.c.l.b16 %v543
      %v580 = vpack.c.b16 %v565, %v564
      %v581 = vpack.c.b16 %v567, %v566
      %v582 = vpack.c.b16 %v569, %v568
      %v583 = vpack.c.b16 %v571, %v570
      %v584 = vpack.c.b16 %v573, %v572
      %v585 = vpack.c.b16 %v575, %v574
      %v586 = vpack.c.b16 %v577, %v576
      %v587 = vpack.c.b16 %v579, %v578
      %596 = vmatpush.bf16.msra.mxu0 %v587
      %597 = vmatpush.bf16.msra.mxu0 %v586
      %598 = vmatpush.bf16.msra.mxu0 %v585
      %599 = vmatpush.bf16.msra.mxu0 %v584
      %600 = vmatpush.bf16.msra.mxu0 %v583
      %601 = vmatpush.bf16.msra.mxu0 %v582
      %602 = vmatpush.bf16.msra.mxu0 %v581
      %603 = vmatpush.bf16.msra.mxu0 %v580
      %604 = vmatmul.bf16.gmra.mxu0 %v526
      %v605 = vpop.f32.mrf.mxu0
      %v606 = vadd.f32 %v546, %v605
      %v607 = vpop.f32.mrf.mxu0
      %v608 = vadd.f32 %v546, %v607
      %609 = vmatmul.bf16.gmra.mxu0 %v527
      %v610 = vpop.f32.mrf.mxu0
      %v611 = vadd.f32 %v546, %v610
      %v612 = vpop.f32.mrf.mxu0
      %v613 = vadd.f32 %v546, %v612
      %614 = vdwg.mxu0
      %v615 = vtanh.pop %v606
      %v616 = vtanh.pop %v608
      %v617 = vtanh.pop %v611
      %v618 = vtanh.pop %v613
      %v619 = vld [vmem:[%s7] sm:$0x1]
      %v621 = vperm.slane %v619, 0
      %v623 = vmul.f32 %v615, %v621
      %v624 = vmul.f32 %v616, %v621
      %v625 = vmul.f32 %v617, %v621
      %v626 = vmul.f32 %v618, %v621
      %v627 = vld [vmem:[%s8] sm:$0x1]
      %v629 = vperm.slane %v627, 0
      %v631 = vadd.f32 %v623, %v629
      %v632 = vadd.f32 %v624, %v629
      %v633 = vadd.f32 %v625, %v629
      %v634 = vadd.f32 %v626, %v629
      %635 = vst [vmem:[%s334] sm:$0xff] %v631
      %636 = vst [vmem:[%s334 + $0x8] sm:$0xff] %v632
      %637 = vst [vmem:[%s334 + $0x10] sm:$0xff] %v633
      %638 = vst [vmem:[%s334 + $0x18] sm:$0xff] %v634
      %s639 = smul.u32 4, %s20
      %p640 = scmp.lt.s32.totalorder %s639, 7
      %s641 = scalar_select %p640, %s639, 7
      %s642 = smul.addr %s641, 8
      %s643 = scalar_lea.vmem %s9, %s642
      // Predicated region
      $region57: #{actor_forward.1} parent=55 // pred_check
        %p644 = pneg %p232
      $region58: #{actor_forward.1} parent=55 // pred_check_branch
        %646 = sbr.rel (%p644) target = $region60
      $region59: #{actor_forward.1} parent=55 // pred_region
        %s647 = smul.u32 4, %s20
      $region60: #{actor_forward.1} parent=55 // pred_fallthru
        _
    $region56: #{actor_forward.1} parent=5 // pred_fallthru
      _
    %p648 = scmp.le.s32.totalorder 2, %s15
    // Predicated region
    $region61: #{actor_forward.1} parent=5 // pred_check
      %p649 = pneg %p648
    $region62: #{actor_forward.1} parent=5 // pred_check_branch
      %651 = sbr.rel (%p649) target = $region64
    $region63: #{actor_forward.1} parent=5 // pred_region
      %s652 = ssub.s32 %s15, 2
      // Predicated region
      $region65: #{actor_forward.1} parent=63 // pred_check
        %p653 = pneg %p238
      $region66: #{actor_forward.1} parent=63 // pred_check_branch
        %655 = sbr.rel (%p653) target = $region68
      $region67: #{actor_forward.1} parent=63 // pred_region
        %s656 = smul.u32 4, %s21
        %p657 = scmp.lt.s32.totalorder %s656, 7
        %s658 = scalar_select %p657, %s656, 7
        %s659 = smul.addr %s658, 8
        %s660 = scalar_lea.vmem %s9, %s659
      $region68: #{actor_forward.1} parent=63 // pred_fallthru
        _
    $region64: #{actor_forward.1} parent=5 // pred_fallthru
      _
  $region6: #{actor_forward.1} parent=0 // loop_footer
    %s19 = sadd.s32 1, %s15
  $region7: #{actor_forward.1} parent=0 // loop_footer_branch
    %14 = sbr.rel target = $region3
  $region8: #{actor_forward.1} parent=0 // loop_exit
    _

</llo_original>
